<compile_context>
chip_gen: v7x
topology: tpu7x:2x2x1
jax: 0.10.0
libtpu: 0.0.40
codegen_flags: <defaults>
</compile_context>

<pallas_src>
import functools

import jax
import jax.numpy as jnp
from jax.experimental import pallas as pl
from jax.experimental.pallas import tpu as pltpu


def _round_up(x, m):
    return ((x + m - 1) // m) * m


def _mlp_kernel(t_ref, x_ref, w0x_ref, w0t_ref, b0_ref, *refs,
                compute_dtype=jnp.float32):
    """DNN_U forward on one batch tile, feature-major.

    t_ref : (1,) f32 in SMEM                (the scalar t)
    x_ref : (d_x, tile_batch)               input tile, batch on lanes
    w0x_ref : (h0, d_x)   layer-0 weight (out, in), x part
    w0t_ref : (h0, 1)     layer-0 weight, t column
    b0_ref  : (h0, 1)
    refs = (w1T, b1T, ..., wLT, bLT, out)
      wiT : (h_i, h_{i-1})   middle weights, (out, in) layout
      biT : (h_i, 1)
      wLT : (d_out, h_last)
      bLT : (d_out, 1)
      out : (d_out, tile_batch)   lane-dense output tile
    """
    out_ref = refs[-1]
    wl_ref = refs[-3]
    bl_ref = refs[-2]
    mid_refs = refs[:-3]
    n_mid = len(mid_refs) // 2

    t = t_ref[0]                                   # scalar from SMEM
    xT = x_ref[...]                                # (d_x, tile)
    d_x = xT.shape[0]

    bias0 = t * w0t_ref[...] + b0_ref[...]         # (h0, 1)

    if d_x <= 8:
        # Rank-1 FMAs on the VPU; an MXU pass with K=d_x<=8 would be wasted.
        w0x = w0x_ref[...]                         # (h0, d_x)
        h = w0x[:, 0:1] * xT[0:1, :]               # (h0, tile)
        for k in range(1, d_x):
            h = h + w0x[:, k:k + 1] * xT[k:k + 1, :]
        h = h + bias0
    else:
        h = jnp.dot(w0x_ref[...].astype(compute_dtype),
                    xT.astype(compute_dtype),
                    preferred_element_type=jnp.float32) + bias0

    for i in range(n_mid):
        h = jnp.tanh(h.astype(compute_dtype))
        h = jnp.dot(mid_refs[2 * i][...], h,
                    preferred_element_type=jnp.float32) + mid_refs[2 * i + 1][...]

    h = jnp.tanh(h.astype(compute_dtype))
    out = jnp.dot(wl_ref[...], h,
                  preferred_element_type=jnp.float32) + bl_ref[...]
    out_ref[...] = out.astype(out_ref.dtype)


def init_dnn_u_params(key, layers):
    """Deterministic init mimicking torch.nn.Linear default U[-1/sqrt(fan_in), ...].

    Weights returned as (in_features, out_features); biases as (1, out_features).
    """
    params = []
    for i in range(len(layers) - 1):
        fan_in, fan_out = layers[i], layers[i + 1]
        key, kw, kb = jax.random.split(key, 3)
        bound = 1.0 / jnp.sqrt(jnp.float32(fan_in))
        w = jax.random.uniform(kw, (fan_in, fan_out), jnp.float32, -bound, bound)
        b = jax.random.uniform(kb, (1, fan_out), jnp.float32, -bound, bound)
        params.append((w, b))
    return params


@functools.partial(jax.jit, static_argnames=("tile_batch", "use_bf16"))
def dnn_u_forward(t, x, params, tile_batch=None, use_bf16=False):
    """Forward pass of DNN_U.  t: scalar, x: (N, d_x) -> (N, d_out)."""
    assert len(params) >= 2, "DNN_U kernel expects at least 2 Linear layers"
    n, d_x = x.shape
    d_out = params[-1][0].shape[1]
    compute_dtype = jnp.bfloat16 if use_bf16 else jnp.float32

    # Large, lane-aligned batch tiles; ensure >=2 grid steps for N>256 so a
    # "parallel" grid can shard across both v7x TensorCores.
    if tile_batch is None:
        if n <= 256:
            tile_batch = _round_up(max(n, 1), 128)
        else:
            tile_batch = min(8192, _round_up((n + 1) // 2, 128))
    tile_batch = _round_up(int(tile_batch), 128)
    n_pad = _round_up(n, tile_batch)
    grid = n_pad // tile_batch

    # Feature-major input (d_x, N_pad); pad and transpose fuse into one copy.
    if n_pad == n:
        x_t = x.T
    else:
        x_t = jnp.pad(x, ((0, n_pad - n), (0, 0))).T

    t_arr = jnp.reshape(jnp.asarray(t, dtype=jnp.float32), (1,))

    # Layer 0: split off the t column and pre-transpose to (out, in).
    w0, b0 = params[0]
    w0t_t = w0[0:1, :].T                        # (h0, 1)
    w0x_t = w0[1:, :].T                         # (h0, d_x)
    b0_t = b0.T                                 # (h0, 1)

    w_last, b_last = params[-1]
    wl_t = w_last.T.astype(compute_dtype)       # (d_out, h_last)
    bl_t = b_last.T                             # (d_out, 1)

    operands = [t_arr, x_t, w0x_t, w0t_t, b0_t]
    in_specs = [
        pl.BlockSpec(memory_space=pltpu.MemorySpace.SMEM),      # t (scalar)
        pl.BlockSpec((d_x, tile_batch), lambda i: (0, i)),      # xT tile
        pl.BlockSpec(w0x_t.shape, lambda i: (0, 0)),
        pl.BlockSpec(w0t_t.shape, lambda i: (0, 0)),
        pl.BlockSpec(b0_t.shape, lambda i: (0, 0)),
    ]
    for (w, b) in params[1:-1]:
        w_t = w.T.astype(compute_dtype)         # (h_i, h_{i-1})
        b_t = b.T                               # (h_i, 1)
        operands.extend([w_t, b_t])
        in_specs.append(pl.BlockSpec(w_t.shape, lambda i: (0, 0)))
        in_specs.append(pl.BlockSpec(b_t.shape, lambda i: (0, 0)))
    operands.extend([wl_t, bl_t])
    in_specs.append(pl.BlockSpec(wl_t.shape, lambda i: (0, 0)))
    in_specs.append(pl.BlockSpec(bl_t.shape, lambda i: (0, 0)))

    kernel = functools.partial(_mlp_kernel, compute_dtype=compute_dtype)

    out_t = pl.pallas_call(
        kernel,
        out_shape=jax.ShapeDtypeStruct((d_out, n_pad), x.dtype),
        grid=(grid,),
        in_specs=in_specs,
        out_specs=pl.BlockSpec((d_out, tile_batch), lambda i: (0, i)),
        compiler_params=pltpu.CompilerParams(
            dimension_semantics=("parallel",)),
    )(*operands)

    # Module returns (N, d_out); transpose+slice of the small output is cheap.
    return out_t.T[:n]


def dnn_u_reference(t, x, params):
    """Pure-JAX reference for verification."""
    n = x.shape[0]
    h = jnp.concatenate([jnp.ones((n, 1), x.dtype) * t, x], axis=1)
    for i, (w, b) in enumerate(params):
        h = h @ w + b
        if i < len(params) - 1:
            h = jnp.tanh(h)
    return h


if __name__ == "__main__":
    # Shapes consistent with the module: layers = [3, 32, 32, 1]
    # => x has layers[0]-1 = 2 features, t is a scalar.
    layers = [3, 32, 32, 1]
    batch = 16

    key = jax.random.PRNGKey(0)
    key, kx = jax.random.split(key)
    x = jax.random.normal(kx, (batch, layers[0] - 1), jnp.float32)
    t = jnp.float32(0.5)

    params = init_dnn_u_params(jax.random.PRNGKey(0), layers)

    out = jax.block_until_ready(dnn_u_forward(t, x, params))
    ref = dnn_u_reference(t, x, params)
    assert out.shape == (batch, layers[-1])
    assert jnp.allclose(out, ref, atol=1e-5, rtol=1e-5)

    # Non-128-multiple batch with an explicit small tile (multi-step grid,
    # exercises the fused pad path).
    x2 = jax.random.normal(jax.random.PRNGKey(1), (300, layers[0] - 1), jnp.float32)
    out2 = jax.block_until_ready(dnn_u_forward(t, x2, params, tile_batch=128))
    ref2 = dnn_u_reference(t, x2, params)
    assert out2.shape == (300, layers[-1])
    assert jnp.allclose(out2, ref2, atol=1e-5, rtol=1e-5)

    # Default tile heuristic with n > 256 (grid >= 2) + ragged last rows.
    x3 = jax.random.normal(jax.random.PRNGKey(2), (600, layers[0] - 1), jnp.float32)
    out3 = jax.block_until_ready(dnn_u_forward(t, x3, params))
    ref3 = dnn_u_reference(t, x3, params)
    assert out3.shape == (600, layers[-1])
    assert jnp.allclose(out3, ref3, atol=1e-5, rtol=1e-5)

    # Wider input (d_x > 8) exercises the MXU path for layer 0.
    layers_b = [17, 64, 8]
    params_b = init_dnn_u_params(jax.random.PRNGKey(3), layers_b)
    xb = jax.random.normal(jax.random.PRNGKey(4), (64, layers_b[0] - 1), jnp.float32)
    outb = jax.block_until_ready(dnn_u_forward(t, xb, params_b))
    refb = dnn_u_reference(t, xb, params_b)
    assert outb.shape == (64, layers_b[-1])
    assert jnp.allclose(outb, refb, atol=1e-4, rtol=1e-4)

    print("KERNEL_OK")
</pallas_src>

<mosaic_0001>
module attributes {stable_mosaic.version = 11 : i64} {
  func.func @_mlp_kernel(%arg0: i32, %arg1: memref<1xf32, #tpu.memory_space<smem>>, %arg2: memref<2x128xf32, #tpu.memory_space<vmem>>, %arg3: memref<32x2xf32, #tpu.memory_space<vmem>>, %arg4: memref<32x1xf32, #tpu.memory_space<vmem>>, %arg5: memref<32x1xf32, #tpu.memory_space<vmem>>, %arg6: memref<32x32xf32, #tpu.memory_space<vmem>>, %arg7: memref<32x1xf32, #tpu.memory_space<vmem>>, %arg8: memref<1x32xf32, #tpu.memory_space<vmem>>, %arg9: memref<1x1xf32, #tpu.memory_space<vmem>>, %arg10: memref<1x128xf32, #tpu.memory_space<vmem>>) attributes {dimension_semantics = [#tpu.dimension_semantics<parallel>], iteration_bounds = array<i64: 1>, scalar_prefetch = 0 : i64, scratch_operands = 0 : i64, tpu.core_type = #tpu.core_type<tc>, window_params = [{transform_indices = @transform_0, window_bounds = array<i64: 1>}, {transform_indices = @transform_1, window_bounds = array<i64: 2, 128>}, {pipeline_mode = #tpu.pipeline_mode<synchronous>, transform_indices = @transform_2, window_bounds = array<i64: 32, 2>}, {pipeline_mode = #tpu.pipeline_mode<synchronous>, transform_indices = @transform_3, window_bounds = array<i64: 32, 1>}, {pipeline_mode = #tpu.pipeline_mode<synchronous>, transform_indices = @transform_4, window_bounds = array<i64: 32, 1>}, {pipeline_mode = #tpu.pipeline_mode<synchronous>, transform_indices = @transform_5, window_bounds = array<i64: 32, 32>}, {pipeline_mode = #tpu.pipeline_mode<synchronous>, transform_indices = @transform_6, window_bounds = array<i64: 32, 1>}, {pipeline_mode = #tpu.pipeline_mode<synchronous>, transform_indices = @transform_7, window_bounds = array<i64: 1, 32>}, {pipeline_mode = #tpu.pipeline_mode<synchronous>, transform_indices = @transform_8, window_bounds = array<i64: 1, 1>}, {transform_indices = @transform_9, window_bounds = array<i64: 1, 128>}]} {
    %c0 = arith.constant 0 : index
    %0 = memref.load %arg1[%c0] : memref<1xf32, #tpu.memory_space<smem>>
    %c0_0 = arith.constant 0 : index
    %c0_1 = arith.constant 0 : index
    %1 = vector.load %arg2[%c0_0, %c0_1] : memref<2x128xf32, #tpu.memory_space<vmem>>, vector<2x128xf32>
    %c0_2 = arith.constant 0 : index
    %c0_3 = arith.constant 0 : index
    %2 = vector.load %arg4[%c0_2, %c0_3] : memref<32x1xf32, #tpu.memory_space<vmem>>, vector<32x1xf32>
    %3 = vector.broadcast %0 : f32 to vector<32x1xf32>
    %4 = arith.mulf %3, %2 : vector<32x1xf32>
    %c0_4 = arith.constant 0 : index
    %c0_5 = arith.constant 0 : index
    %5 = vector.load %arg5[%c0_4, %c0_5] : memref<32x1xf32, #tpu.memory_space<vmem>>, vector<32x1xf32>
    %6 = arith.addf %4, %5 : vector<32x1xf32>
    %c0_6 = arith.constant 0 : index
    %c0_7 = arith.constant 0 : index
    %7 = vector.load %arg3[%c0_6, %c0_7] : memref<32x2xf32, #tpu.memory_space<vmem>>, vector<32x2xf32>
    %8 = vector.extract_strided_slice %7 {offsets = [0, 0], sizes = [32, 1], strides = [1, 1]} : vector<32x2xf32> to vector<32x1xf32>
    %9 = vector.extract_strided_slice %1 {offsets = [0, 0], sizes = [1, 128], strides = [1, 1]} : vector<2x128xf32> to vector<1x128xf32>
    %10 = vector.broadcast %8 : vector<32x1xf32> to vector<32x128xf32>
    %11 = vector.broadcast %9 : vector<1x128xf32> to vector<32x128xf32>
    %12 = arith.mulf %10, %11 : vector<32x128xf32>
    %13 = vector.extract_strided_slice %7 {offsets = [0, 1], sizes = [32, 1], strides = [1, 1]} : vector<32x2xf32> to vector<32x1xf32>
    %14 = vector.extract_strided_slice %1 {offsets = [1, 0], sizes = [1, 128], strides = [1, 1]} : vector<2x128xf32> to vector<1x128xf32>
    %15 = vector.broadcast %13 : vector<32x1xf32> to vector<32x128xf32>
    %16 = vector.broadcast %14 : vector<1x128xf32> to vector<32x128xf32>
    %17 = arith.mulf %15, %16 : vector<32x128xf32>
    %18 = arith.addf %12, %17 : vector<32x128xf32>
    %19 = vector.broadcast %6 : vector<32x1xf32> to vector<32x128xf32>
    %20 = arith.addf %18, %19 : vector<32x128xf32>
    %21 = math.tanh %20 : vector<32x128xf32>
    %c0_8 = arith.constant 0 : index
    %c0_9 = arith.constant 0 : index
    %22 = vector.load %arg6[%c0_8, %c0_9] : memref<32x32xf32, #tpu.memory_space<vmem>>, vector<32x32xf32>
    %cst = arith.constant dense<0.000000e+00> : vector<32x128xf32>
    %23 = tpu.matmul %22, %21, %cst {dimension_numbers = #tpu.dot_dimension_numbers<[1], [0], [0], [1], [0, 0, 1, 1], [], []>} : vector<32x32xf32>, vector<32x128xf32>, vector<32x128xf32> -> vector<32x128xf32>
    %c0_10 = arith.constant 0 : index
    %c0_11 = arith.constant 0 : index
    %24 = vector.load %arg7[%c0_10, %c0_11] : memref<32x1xf32, #tpu.memory_space<vmem>>, vector<32x1xf32>
    %25 = vector.broadcast %24 : vector<32x1xf32> to vector<32x128xf32>
    %26 = arith.addf %23, %25 : vector<32x128xf32>
    %27 = math.tanh %26 : vector<32x128xf32>
    %c0_12 = arith.constant 0 : index
    %c0_13 = arith.constant 0 : index
    %28 = vector.load %arg8[%c0_12, %c0_13] : memref<1x32xf32, #tpu.memory_space<vmem>>, vector<1x32xf32>
    %cst_14 = arith.constant dense<0.000000e+00> : vector<1x128xf32>
    %29 = tpu.matmul %28, %27, %cst_14 {dimension_numbers = #tpu.dot_dimension_numbers<[1], [0], [0], [1], [0, 0, 1, 1], [], []>} : vector<1x32xf32>, vector<32x128xf32>, vector<1x128xf32> -> vector<1x128xf32>
    %c0_15 = arith.constant 0 : index
    %c0_16 = arith.constant 0 : index
    %30 = vector.load %arg9[%c0_15, %c0_16] : memref<1x1xf32, #tpu.memory_space<vmem>>, vector<1x1xf32>
    %31 = vector.broadcast %30 : vector<1x1xf32> to vector<1x128xf32>
    %32 = arith.addf %29, %31 : vector<1x128xf32>
    %c0_17 = arith.constant 0 : index
    %c0_18 = arith.constant 0 : index
    %33 = vector.load %arg10[%c0_17, %c0_18] : memref<1x128xf32, #tpu.memory_space<vmem>>, vector<1x128xf32>
    tpu.vector_store %arg10[%c0_17, %c0_18], %32 {strides = array<i32>} : memref<1x128xf32, #tpu.memory_space<vmem>>, vector<1x128xf32>,
    return
  }
  func.func @transform_0(%arg0: i32) -> i32 {
    %c0_i32 = arith.constant 0 : i32
    %c0_i32_0 = arith.constant 0 : i32
    return %c0_i32 : i32
  }
  func.func @transform_1(%arg0: i32) -> (i32, i32) {
    %c0_i32 = arith.constant 0 : i32
    %c0_i32_0 = arith.constant 0 : i32
    return %c0_i32, %arg0 : i32, i32
  }
  func.func @transform_2(%arg0: i32) -> (i32, i32) {
    %c0_i32 = arith.constant 0 : i32
    %c0_i32_0 = arith.constant 0 : i32
    %c0_i32_1 = arith.constant 0 : i32
    return %c0_i32, %c0_i32_0 : i32, i32
  }
  func.func @transform_3(%arg0: i32) -> (i32, i32) {
    %c0_i32 = arith.constant 0 : i32
    %c0_i32_0 = arith.constant 0 : i32
    %c0_i32_1 = arith.constant 0 : i32
    return %c0_i32, %c0_i32_0 : i32, i32
  }
  func.func @transform_4(%arg0: i32) -> (i32, i32) {
    %c0_i32 = arith.constant 0 : i32
    %c0_i32_0 = arith.constant 0 : i32
    %c0_i32_1 = arith.constant 0 : i32
    return %c0_i32, %c0_i32_0 : i32, i32
  }
  func.func @transform_5(%arg0: i32) -> (i32, i32) {
    %c0_i32 = arith.constant 0 : i32
    %c0_i32_0 = arith.constant 0 : i32
    %c0_i32_1 = arith.constant 0 : i32
    return %c0_i32, %c0_i32_0 : i32, i32
  }
  func.func @transform_6(%arg0: i32) -> (i32, i32) {
    %c0_i32 = arith.constant 0 : i32
    %c0_i32_0 = arith.constant 0 : i32
    %c0_i32_1 = arith.constant 0 : i32
    return %c0_i32, %c0_i32_0 : i32, i32
  }
  func.func @transform_7(%arg0: i32) -> (i32, i32) {
    %c0_i32 = arith.constant 0 : i32
    %c0_i32_0 = arith.constant 0 : i32
    %c0_i32_1 = arith.constant 0 : i32
    return %c0_i32, %c0_i32_0 : i32, i32
  }
  func.func @transform_8(%arg0: i32) -> (i32, i32) {
    %c0_i32 = arith.constant 0 : i32
    %c0_i32_0 = arith.constant 0 : i32
    %c0_i32_1 = arith.constant 0 : i32
    return %c0_i32, %c0_i32_0 : i32, i32
  }
  func.func @transform_9(%arg0: i32) -> (i32, i32) {
    %c0_i32 = arith.constant 0 : i32
    %c0_i32_0 = arith.constant 0 : i32
    return %c0_i32, %arg0 : i32, i32
  }
}

</mosaic_0001>

<llo_original>
// kernel: dnn_u_forward.1
$region0: #{dnn_u_forward.1}
  #allocation0 [shape = 'u32[]', space=smem, size = 0x4, offset = 0x4, fixed_abs, tag = 'smem constant byte address 0x4 - core index']
  #allocation1 [shape = 'u32[144,128]{1,0:T(1,128)}', space=vmem, size = 0x12000, scoped, tag = 'internal scratch']
  #allocation2 [shape = 'f32[1]{0:T(128)S(6)}', space=smem, size = 0x200, scoped, tag = 'scoped memory for dnn_u_forward.1']
  #allocation3 [shape = 'f32[1,1]{1,0:T(1,128)S(1)}', space=vmem, size = 0x200, scoped, tag = 'scoped memory for dnn_u_forward.1']
  %s0 = inlined_call_operand.<no memory space> [shape: f32[1], index: 0, kind: input, shape index: {}]
  %s1 = inlined_call_operand.vmem [shape: f32[2,128], index: 1, kind: input, shape index: {}]
  %s2 = inlined_call_operand.vmem [shape: f32[32,2], index: 2, kind: input, shape index: {}]
  %s3 = inlined_call_operand.vmem [shape: f32[32,1], index: 3, kind: input, shape index: {}]
  %s4 = inlined_call_operand.vmem [shape: f32[32,1], index: 4, kind: input, shape index: {}]
  %s5 = inlined_call_operand.vmem [shape: f32[32,32], index: 5, kind: input, shape index: {}]
  %s6 = inlined_call_operand.vmem [shape: f32[32,1], index: 6, kind: input, shape index: {}]
  %s7 = inlined_call_operand.vmem [shape: f32[1,32], index: 7, kind: input, shape index: {}]
  %s8 = inlined_call_operand.<no memory space> [shape: f32[1,1], index: 8, kind: input, shape index: {}]
  %s9 = inlined_call_operand.vmem [shape: f32[1,128], index: 9, kind: output, shape index: {}]
  %s10 = sld [smem:[#allocation0]]
  $region46: #{dnn_u_forward.1} parent=0
    _
  %s12 = ssub.s32 1, %s10
  %s13 = scalar_select 0, %s12, %s10
  %14 = sst [smem:[#allocation2]] %s0
  %v15 = vstv %s8
  %16 = vst [vmem:[#allocation3] sm:$0x1] %v15
  // Predicated region
  $region2: #{dnn_u_forward.1} parent=0 // pred_check
    _
  $region3: #{dnn_u_forward.1} parent=0 // pred_check_branch
    %18 = sbr.rel (0) target = $region5
  $region4: #{dnn_u_forward.1} parent=0 // pred_region
    _
  $region5: #{dnn_u_forward.1} parent=0 // pred_fallthru
    _
  // Predicated region
  $region6: #{dnn_u_forward.1} parent=0 // pred_check
    _
  $region7: #{dnn_u_forward.1} parent=0 // pred_check_branch
    %20 = sbr.rel (0) target = $region9
  $region8: #{dnn_u_forward.1} parent=0 // pred_region
    _
  $region9: #{dnn_u_forward.1} parent=0 // pred_fallthru
    _
  // Predicated region
  $region10: #{dnn_u_forward.1} parent=0 // pred_check
    _
  $region11: #{dnn_u_forward.1} parent=0 // pred_check_branch
    %22 = sbr.rel (0) target = $region13
  $region12: #{dnn_u_forward.1} parent=0 // pred_region
    _
  $region13: #{dnn_u_forward.1} parent=0 // pred_fallthru
    _
  // Predicated region
  $region14: #{dnn_u_forward.1} parent=0 // pred_check
    _
  $region15: #{dnn_u_forward.1} parent=0 // pred_check_branch
    %24 = sbr.rel (0) target = $region17
  $region16: #{dnn_u_forward.1} parent=0 // pred_region
    _
  $region17: #{dnn_u_forward.1} parent=0 // pred_fallthru
    _
  // Predicated region
  $region18: #{dnn_u_forward.1} parent=0 // pred_check
    _
  $region19: #{dnn_u_forward.1} parent=0 // pred_check_branch
    %26 = sbr.rel (0) target = $region21
  $region20: #{dnn_u_forward.1} parent=0 // pred_region
    _
  $region21: #{dnn_u_forward.1} parent=0 // pred_fallthru
    _
  // Predicated region
  $region22: #{dnn_u_forward.1} parent=0 // pred_check
    _
  $region23: #{dnn_u_forward.1} parent=0 // pred_check_branch
    %28 = sbr.rel (0) target = $region25
  $region24: #{dnn_u_forward.1} parent=0 // pred_region
    _
  $region25: #{dnn_u_forward.1} parent=0 // pred_fallthru
    _
  // Predicated region
  $region26: #{dnn_u_forward.1} parent=0 // pred_check
    _
  $region27: #{dnn_u_forward.1} parent=0 // pred_check_branch
    %30 = sbr.rel (0) target = $region29
  $region28: #{dnn_u_forward.1} parent=0 // pred_region
    _
  $region29: #{dnn_u_forward.1} parent=0 // pred_fallthru
    _
  // Predicated region
  $region30: #{dnn_u_forward.1} parent=0 // pred_check
    _
  $region31: #{dnn_u_forward.1} parent=0 // pred_check_branch
    %32 = sbr.rel (0) target = $region33
  $region32: #{dnn_u_forward.1} parent=0 // pred_region
    _
  $region33: #{dnn_u_forward.1} parent=0 // pred_fallthru
    _
  // Predicated region
  $region34: #{dnn_u_forward.1} parent=0 // pred_check
    _
  $region35: #{dnn_u_forward.1} parent=0 // pred_check_branch
    %34 = sbr.rel (0) target = $region37
  $region36: #{dnn_u_forward.1} parent=0 // pred_region
    _
  $region37: #{dnn_u_forward.1} parent=0 // pred_fallthru
    _
  %s35 = sld [smem:[#allocation2]]
  %v36 = vld [vmem:[%s1] sm:$0x3]
  %v37 = vld [vmem:[%s3] sm:$0xff]
  %v38 = vld [vmem:[%s3 + $0x8] sm:$0xff]
  %v39 = vld [vmem:[%s3 + $0x10] sm:$0xff]
  %v40 = vld [vmem:[%s3 + $0x18] sm:$0xff]
  %v41 = vstv %s35
  %v42 = vmul.f32 %v41, %v37
  %v43 = vmul.f32 %v41, %v38
  %v44 = vmul.f32 %v41, %v39
  %v45 = vmul.f32 %v41, %v40
  %v46 = vld [vmem:[%s4] sm:$0xff]
  %v47 = vld [vmem:[%s4 + $0x8] sm:$0xff]
  %v48 = vld [vmem:[%s4 + $0x10] sm:$0xff]
  %v49 = vld [vmem:[%s4 + $0x18] sm:$0xff]
  %v50 = vadd.f32 %v42, %v46
  %v51 = vadd.f32 %v43, %v47
  %v52 = vadd.f32 %v44, %v48
  %v53 = vadd.f32 %v45, %v49
  %v54 = vld [vmem:[%s2] sm:$0xff]
  %v55 = vld [vmem:[%s2 + $0x8] sm:$0xff]
  %v56 = vld [vmem:[%s2 + $0x10] sm:$0xff]
  %v57 = vld [vmem:[%s2 + $0x18] sm:$0xff]
  %59 = vset.pattern.permute.xlu0 0
  %60 = vperm.xlu0 %59, %v54
  %v61 = vpop.permute.xlu0 %60
  %64 = vset.pattern.permute.xlu0 0
  %65 = vperm.xlu0 %64, %v55
  %v66 = vpop.permute.xlu0 %65
  %69 = vset.pattern.permute.xlu0 0
  %70 = vperm.xlu0 %69, %v56
  %v71 = vpop.permute.xlu0 %70
  %74 = vset.pattern.permute.xlu0 0
  %75 = vperm.xlu0 %74, %v57
  %v76 = vpop.permute.xlu0 %75
  %v78 = vlaneseq
  %v79 = vshrl.u32 %v78, 7
  %v80 = vsub.s32 0, %v79
  %v81 = vrot.slane %v36, %v80
  %v82 = vmul.f32 %v61, %v81
  %v83 = vmul.f32 %v66, %v81
  %v84 = vmul.f32 %v71, %v81
  %v85 = vmul.f32 %v76, %v81
  %86 = vset.pattern.permute.xlu0 1
  %87 = vperm.xlu0 %86, %v54
  %v88 = vpop.permute.xlu0 %87
  %90 = vset.pattern.permute.xlu0 1
  %91 = vperm.xlu0 %90, %v55
  %v92 = vpop.permute.xlu0 %91
  %94 = vset.pattern.permute.xlu0 1
  %95 = vperm.xlu0 %94, %v56
  %v96 = vpop.permute.xlu0 %95
  %98 = vset.pattern.permute.xlu0 1
  %99 = vperm.xlu0 %98, %v57
  %v100 = vpop.permute.xlu0 %99
  %v102 = vlaneseq
  %v103 = vshrl.u32 %v102, 7
  %v104 = vsub.s32 1, %v103
  %v105 = vrot.slane %v36, %v104
  %v106 = vmul.f32 %v88, %v105
  %v107 = vmul.f32 %v92, %v105
  %v108 = vmul.f32 %v96, %v105
  %v109 = vmul.f32 %v100, %v105
  %v110 = vadd.f32 %v82, %v106
  %v111 = vadd.f32 %v83, %v107
  %v112 = vadd.f32 %v84, %v108
  %v113 = vadd.f32 %v85, %v109
  %115 = vset.pattern.permute.xlu0 0
  %116 = vperm.xlu0 %115, %v50
  %v117 = vpop.permute.xlu0 %116
  %120 = vset.pattern.permute.xlu0 0
  %121 = vperm.xlu0 %120, %v51
  %v122 = vpop.permute.xlu0 %121
  %125 = vset.pattern.permute.xlu0 0
  %126 = vperm.xlu0 %125, %v52
  %v127 = vpop.permute.xlu0 %126
  %130 = vset.pattern.permute.xlu0 0
  %131 = vperm.xlu0 %130, %v53
  %v132 = vpop.permute.xlu0 %131
  %v134 = vadd.f32 %v110, %v117
  %v135 = vadd.f32 %v111, %v122
  %v136 = vadd.f32 %v112, %v127
  %v137 = vadd.f32 %v113, %v132
  %v138 = vtanh.pop %v134
  %v139 = vtanh.pop %v135
  %v140 = vtanh.pop %v136
  %v141 = vtanh.pop %v137
  %v142 = vld [vmem:[%s5] sm:$0xff]
  %v143 = vld [vmem:[%s5 + $0x8] sm:$0xff]
  %v144 = vld [vmem:[%s5 + $0x10] sm:$0xff]
  %v145 = vld [vmem:[%s5 + $0x18] sm:$0xff]
  %v146 = vld [vmem:[%s6] sm:$0xff]
  %v147 = vld [vmem:[%s6 + $0x8] sm:$0xff]
  %v148 = vld [vmem:[%s6 + $0x10] sm:$0xff]
  %v149 = vld [vmem:[%s6 + $0x18] sm:$0xff]
  %151 = vset.pattern.permute.xlu0 0
  %152 = vperm.xlu0 %151, %v146
  %v153 = vpop.permute.xlu0 %152
  %156 = vset.pattern.permute.xlu0 0
  %157 = vperm.xlu0 %156, %v147
  %v158 = vpop.permute.xlu0 %157
  %161 = vset.pattern.permute.xlu0 0
  %162 = vperm.xlu0 %161, %v148
  %v163 = vpop.permute.xlu0 %162
  %166 = vset.pattern.permute.xlu0 0
  %167 = vperm.xlu0 %166, %v149
  %v168 = vpop.permute.xlu0 %167
  %vm170 = vcmask 261120
  %v172 = vsel %vm170, %v142, 0
  %v175 = vsel %vm170, %v143, 0
  %v178 = vsel %vm170, %v144, 0
  %v181 = vsel %vm170, %v145, 0
  %183 = vmatprep.subr.mxu0 0.0
  %184 = vmatpush1.msra.mxu0 %v138
  %185 = vmatprep.subr.mxu0 0.0
  %186 = vmatpush1.msra.mxu0 %v139
  %187 = vmatprep.subr.mxu0 0.0
  %188 = vmatpush1.msra.mxu0 %v140
  %189 = vmatprep.subr.mxu0 0.0
  %190 = vmatpush1.msra.mxu0 %v141
  %191 = vmatprep.subr.mxu0 0.0
  %192 = vmatpush1.msra.mxu0 0.0
  %193 = vmatprep.subr.mxu0 0.0
  %194 = vmatpush1.msra.mxu0 0.0
  %195 = vmatprep.subr.mxu0 0.0
  %196 = vmatpush1.msra.mxu0 0.0
  %197 = vmatprep.subr.mxu0 0.0
  %198 = vmatpush1.msra.mxu0 0.0
  %199 = vmatprep.subr.mxu0 0.0
  %200 = vmatpush1.msra.mxu0 0.0
  %201 = vmatprep.subr.mxu0 0.0
  %202 = vmatpush1.msra.mxu0 0.0
  %203 = vmatprep.subr.mxu0 0.0
  %204 = vmatpush1.msra.mxu0 0.0
  %205 = vmatprep.subr.mxu0 0.0
  %206 = vmatpush1.msra.mxu0 0.0
  %207 = vmatprep.subr.mxu0 0.0
  %208 = vmatpush1.msra.mxu0 0.0
  %209 = vmatprep.subr.mxu0 0.0
  %210 = vmatpush1.msra.mxu0 0.0
  %211 = vmatprep.subr.mxu0 0.0
  %212 = vmatpush1.msra.mxu0 0.0
  %213 = vmatprep.subr.mxu0 0.0
  %214 = vmatpush1.msra.mxu0 0.0
  %215 = vmatprep.subr.mxu0 0.0
  %216 = vmatpush1.msra.mxu0 0.0
  %217 = vmatprep.subr.mxu0 0.0
  %218 = vmatpush1.msra.mxu0 0.0
  %219 = vmatprep.subr.mxu0 0.0
  %220 = vmatpush1.msra.mxu0 0.0
  %221 = vmatprep.subr.mxu0 0.0
  %222 = vmatpush1.msra.mxu0 0.0
  %223 = vmatprep.subr.mxu0 0.0
  %224 = vmatpush1.msra.mxu0 0.0
  %225 = vmatprep.subr.mxu0 0.0
  %226 = vmatpush1.msra.mxu0 0.0
  %227 = vmatprep.subr.mxu0 0.0
  %228 = vmatpush1.msra.mxu0 0.0
  %229 = vmatprep.subr.mxu0 0.0
  %230 = vmatpush1.msra.mxu0 0.0
  %231 = vmatprep.subr.mxu0 0.0
  %232 = vmatpush1.msra.mxu0 0.0
  %233 = vmatprep.subr.mxu0 0.0
  %234 = vmatpush1.msra.mxu0 0.0
  %235 = vmatprep.subr.mxu0 0.0
  %236 = vmatpush1.msra.mxu0 0.0
  %237 = vmatprep.subr.mxu0 0.0
  %238 = vmatpush1.msra.mxu0 0.0
  %239 = vmatprep.subr.mxu0 0.0
  %240 = vmatpush1.msra.mxu0 0.0
  %241 = vmatprep.subr.mxu0 0.0
  %242 = vmatpush1.msra.mxu0 0.0
  %243 = vmatprep.subr.mxu0 0.0
  %244 = vmatpush1.msra.mxu0 0.0
  %245 = vmatprep.subr.mxu0 0.0
  %246 = vmatpush1.msra.mxu0 0.0
  %247 = vmatprep.mubr.f32.mxu0 0.0
  %248 = vmatmul.mubr.f32.gmra.mrb[0].mxu0 %v172
  %v249 = vpop.f32.mrb[0].mxu0
  %v250 = vadd.f32 %v153, %v249
  %v251 = vpop.f32.mrb[0].mxu0
  %252 = vmatprep.mubr.f32.mxu0 0.0
  %253 = vmatmul.mubr.f32.gmra.mrb[0].mxu0 %v175
  %v254 = vpop.f32.mrb[0].mxu0
  %v255 = vadd.f32 %v158, %v254
  %v256 = vpop.f32.mrb[0].mxu0
  %257 = vmatprep.mubr.f32.mxu0 0.0
  %258 = vmatmul.mubr.f32.gmra.mrb[0].mxu0 %v178
  %v259 = vpop.f32.mrb[0].mxu0
  %v260 = vadd.f32 %v163, %v259
  %v261 = vpop.f32.mrb[0].mxu0
  %262 = vmatprep.mubr.f32.mxu0 0.0
  %263 = vmatmul.mubr.f32.gmra.mrb[0].mxu0 %v181
  %v264 = vpop.f32.mrb[0].mxu0
  %v265 = vadd.f32 %v168, %v264
  %v266 = vpop.f32.mrb[0].mxu0
  %267 = vdwg.mxu0
  %v268 = vtanh.pop %v250
  %v269 = vtanh.pop %v255
  %v270 = vtanh.pop %v260
  %v271 = vtanh.pop %v265
  %v272 = vld [vmem:[%s7] sm:$0x1]
  %v273 = vld [vmem:[#allocation3] sm:$0x1]
  %275 = vset.pattern.permute.xlu0 0
  %276 = vperm.xlu0 %275, %v273
  %v277 = vpop.permute.xlu0 %276
  %v279 = vlaneseq
  %v280 = vshrl.u32 %v279, 7
  %v281 = vsub.s32 0, %v280
  %v282 = vrot.slane %v277, %v281
  %v284 = vsel %vm170, %v272, 0
  %286 = vmatprep.subr.mxu0 0.0
  %287 = vmatpush1.msra.mxu0 %v268
  %288 = vmatprep.subr.mxu0 0.0
  %289 = vmatpush1.msra.mxu0 %v269
  %290 = vmatprep.subr.mxu0 0.0
  %291 = vmatpush1.msra.mxu0 %v270
  %292 = vmatprep.subr.mxu0 0.0
  %293 = vmatpush1.msra.mxu0 %v271
  %294 = vmatprep.subr.mxu0 0.0
  %295 = vmatpush1.msra.mxu0 0.0
  %296 = vmatprep.subr.mxu0 0.0
  %297 = vmatpush1.msra.mxu0 0.0
  %298 = vmatprep.subr.mxu0 0.0
  %299 = vmatpush1.msra.mxu0 0.0
  %300 = vmatprep.subr.mxu0 0.0
  %301 = vmatpush1.msra.mxu0 0.0
  %302 = vmatprep.subr.mxu0 0.0
  %303 = vmatpush1.msra.mxu0 0.0
  %304 = vmatprep.subr.mxu0 0.0
  %305 = vmatpush1.msra.mxu0 0.0
  %306 = vmatprep.subr.mxu0 0.0
  %307 = vmatpush1.msra.mxu0 0.0
  %308 = vmatprep.subr.mxu0 0.0
  %309 = vmatpush1.msra.mxu0 0.0
  %310 = vmatprep.subr.mxu0 0.0
  %311 = vmatpush1.msra.mxu0 0.0
  %312 = vmatprep.subr.mxu0 0.0
  %313 = vmatpush1.msra.mxu0 0.0
  %314 = vmatprep.subr.mxu0 0.0
  %315 = vmatpush1.msra.mxu0 0.0
  %316 = vmatprep.subr.mxu0 0.0
  %317 = vmatpush1.msra.mxu0 0.0
  %318 = vmatprep.subr.mxu0 0.0
  %319 = vmatpush1.msra.mxu0 0.0
  %320 = vmatprep.subr.mxu0 0.0
  %321 = vmatpush1.msra.mxu0 0.0
  %322 = vmatprep.subr.mxu0 0.0
  %323 = vmatpush1.msra.mxu0 0.0
  %324 = vmatprep.subr.mxu0 0.0
  %325 = vmatpush1.msra.mxu0 0.0
  %326 = vmatprep.subr.mxu0 0.0
  %327 = vmatpush1.msra.mxu0 0.0
  %328 = vmatprep.subr.mxu0 0.0
  %329 = vmatpush1.msra.mxu0 0.0
  %330 = vmatprep.subr.mxu0 0.0
  %331 = vmatpush1.msra.mxu0 0.0
  %332 = vmatprep.subr.mxu0 0.0
  %333 = vmatpush1.msra.mxu0 0.0
  %334 = vmatprep.subr.mxu0 0.0
  %335 = vmatpush1.msra.mxu0 0.0
  %336 = vmatprep.subr.mxu0 0.0
  %337 = vmatpush1.msra.mxu0 0.0
  %338 = vmatprep.subr.mxu0 0.0
  %339 = vmatpush1.msra.mxu0 0.0
  %340 = vmatprep.subr.mxu0 0.0
  %341 = vmatpush1.msra.mxu0 0.0
  %342 = vmatprep.subr.mxu0 0.0
  %343 = vmatpush1.msra.mxu0 0.0
  %344 = vmatprep.subr.mxu0 0.0
  %345 = vmatpush1.msra.mxu0 0.0
  %346 = vmatprep.subr.mxu0 0.0
  %347 = vmatpush1.msra.mxu0 0.0
  %348 = vmatprep.subr.mxu0 0.0
  %349 = vmatpush1.msra.mxu0 0.0
  %350 = vmatprep.mubr.f32.mxu0 0.0
  %351 = vmatmul.mubr.f32.gmra.mrb[0].mxu0 %v284
  %v352 = vpop.f32.mrb[0].mxu0
  %v353 = vadd.f32 %v282, %v352
  %v354 = vpop.f32.mrb[0].mxu0
  %355 = vdwg.mxu0
  %356 = vst [vmem:[%s9] sm:$0x1] %v353
  // Predicated region
  $region38: #{dnn_u_forward.1} parent=0 // pred_check
    _
  $region39: #{dnn_u_forward.1} parent=0 // pred_check_branch
    %358 = sbr.rel (0) target = $region41
  $region40: #{dnn_u_forward.1} parent=0 // pred_region
    _
  $region41: #{dnn_u_forward.1} parent=0 // pred_fallthru
    _
  // Predicated region
  $region42: #{dnn_u_forward.1} parent=0 // pred_check
    _
  $region43: #{dnn_u_forward.1} parent=0 // pred_check_branch
    %360 = sbr.rel (0) target = $region45
  $region44: #{dnn_u_forward.1} parent=0 // pred_region
    _
  $region45: #{dnn_u_forward.1} parent=0 // pred_fallthru
    _

</llo_original>
